<compile_context>
chip_gen: v5e
topology: v5e:2x2
jax: 0.10.0
libtpu: 0.0.40
codegen_flags: <defaults>
</compile_context>

<pallas_src>
import jax
import jax.numpy as jnp
from jax.experimental import pallas as pl
from jax.experimental.pallas import tpu as pltpu

H = 50           # hidden width of both MLPs
X_OFF = 64       # lane offset where the net_x branch lives
LANES = 128
IN_PAD = 8       # padded input feature width ([y | y**3] = 4 features)
MAX_TILE_B = 2048
EPS = 100        # unused in forward (kept for parity with the PyTorch module)


def _ode_kernel(y_ref, w1_ref, b1_ref, w2_ref, b2_ref, w3_ref, b3_ref, o_ref):
    """Fused hot path: 1 K=8 dot + 2 K=128 dots, 2 tanh tiles, 1 lane-select."""
    wdt = w1_ref.dtype
    lhs = y_ref[...]                       # (TILE_B, 8) f32: lanes 0:2=y, 2:4=y**3

    # Layer 1 of BOTH branches in a single K=8 dot:
    # cols 0:50 = net_y hidden, cols 64:114 = net_x hidden-1.
    s1 = jnp.dot(lhs.astype(wdt), w1_ref[...],
                 preferred_element_type=jnp.float32) + b1_ref[...]
    h = jnp.tanh(s1)                       # lanes 0:50 = hy, 64:114 = h1x, rest 0

    # net_x layer 2; w2 block sits at [64:114, 64:114] so h2's lanes 64:114
    # hold net_x hidden-2 and every other lane stays tanh(0) = 0.
    s2 = jnp.dot(h.astype(wdt), w2_ref[...],
                 preferred_element_type=jnp.float32) + b2_ref[...]
    h2 = jnp.tanh(s2)                      # lanes 64:114 = h2x, rest 0

    # Lane-select merge (one VPU select per vreg), then ONE final dot against
    # W3comb (rows 0:50 = wy2, rows 64:114 = wx3) with bias (by2 + bx3):
    # lanes 0:2 of `out` = x_out + y_out.
    lane = jax.lax.broadcasted_iota(jnp.int32, h.shape, 1)
    hc = jnp.where(lane < X_OFF, h, h2)
    out = jnp.dot(hc.astype(wdt), w3_ref[...],
                  preferred_element_type=jnp.float32) + b3_ref[...]
    o_ref[...] = out.astype(o_ref.dtype)


def init_params(key):
    """N(0, 0.1) weights, zero biases (matches the PyTorch init).

    Weights stored as [in_features, out_features] (transpose of PyTorch).
    """
    ks = jax.random.split(key, 5)
    std = 0.1
    wy1 = std * jax.random.normal(ks[0], (4, H), jnp.float32)
    by1 = jnp.zeros((H,), jnp.float32)
    wy2 = std * jax.random.normal(ks[1], (H, 2), jnp.float32)
    by2 = jnp.zeros((2,), jnp.float32)
    wx1 = std * jax.random.normal(ks[2], (4, H), jnp.float32)
    bx1 = jnp.zeros((H,), jnp.float32)
    wx2 = std * jax.random.normal(ks[3], (H, H), jnp.float32)
    bx2 = jnp.zeros((H,), jnp.float32)
    wx3 = std * jax.random.normal(ks[4], (H, 2), jnp.float32)
    bx3 = jnp.zeros((2,), jnp.float32)
    return (wy1, by1, wy2, by2, wx1, bx1, wx2, bx2, wx3, bx3)


def prepare_params(params, weight_dtype=jnp.bfloat16):
    """Pack + pad the weights ONCE (hoisted out of the per-call hot path).

    Padding invariant: biases are zero in all padded/unused lanes, so
    tanh(0 + 0) = 0 there, and those lanes only ever hit zero weight rows
    downstream.  Biases stay f32 (added on the VPU); weights go to
    `weight_dtype` (bf16 by default -> MXU-native on v6e/v7x, f32 accumulate).
    """
    (wy1, by1, wy2, by2, wx1, bx1, wx2, bx2, wx3, bx3) = [
        jnp.asarray(p, jnp.float32) for p in params]

    # Layer 1 (both branches fused along lanes). Rows 0:4 <- [y, y**3] features.
    w1 = jnp.zeros((IN_PAD, LANES), jnp.float32)
    w1 = w1.at[0:4, 0:H].set(wy1).at[0:4, X_OFF:X_OFF + H].set(wx1)
    b1 = jnp.zeros((1, LANES), jnp.float32)
    b1 = b1.at[0, 0:H].set(by1).at[0, X_OFF:X_OFF + H].set(bx1)

    # net_x layer 2, input AND output packed in lanes 64:114.
    w2 = jnp.zeros((LANES, LANES), jnp.float32)
    w2 = w2.at[X_OFF:X_OFF + H, X_OFF:X_OFF + H].set(wx2)
    b2 = jnp.zeros((1, LANES), jnp.float32).at[0, X_OFF:X_OFF + H].set(bx2)

    # Combined final projection: rows 0:50 = wy2 (net_y), rows 64:114 = wx3
    # (net_x); bias is the pre-summed by2 + bx3 so out = x_out + y_out.
    w3 = jnp.zeros((LANES, LANES), jnp.float32)
    w3 = w3.at[0:H, 0:2].set(wy2).at[X_OFF:X_OFF + H, 0:2].set(wx3)
    b3 = jnp.zeros((1, LANES), jnp.float32).at[0, 0:2].set(by2 + bx3)

    return (w1.astype(weight_dtype), b1,
            w2.astype(weight_dtype), b2,
            w3.astype(weight_dtype), b3)


def _round_up(x, m):
    return ((x + m - 1) // m) * m


def _cdiv(a, b):
    return -(-a // b)


@jax.jit
def ode_func_layered_combined(t, y, packed_params):
    """y: (B, 2) -> (B, 2) float32. `t` is unused (matches the PyTorch module)."""
    del t
    B = y.shape[0]

    # Balanced tiling: minimal number of (near-)equal tiles, rounded to a
    # multiple of 8 rows; even tile count when multi-tile so v7x's two
    # TensorCores split the "parallel" batch axis evenly.
    n_tiles = _cdiv(B, MAX_TILE_B)
    if n_tiles > 1:
        n_tiles = _round_up(n_tiles, 2)
    tile_b = _round_up(_cdiv(B, n_tiles), 8)
    b_pad = n_tiles * tile_b

    # Per-call glue: build the padded [y | y**3] input (lanes 0:2 = y,
    # lanes 2:4 = y**3, rest zero; rows B:b_pad zero).
    yf = y.astype(jnp.float32)
    y_in = jnp.zeros((b_pad, IN_PAD), jnp.float32)
    y_in = y_in.at[:B, 0:2].set(yf).at[:B, 2:4].set(yf * yf * yf)
    # TODO(synk): for tiny solver-style batches (B~8) the pad/slice glue and the
    # kernel launch dominate; batching multiple ODE states per call is the fix.

    w1, b1, w2, b2, w3, b3 = packed_params

    def batch_spec(width):
        return pl.BlockSpec((tile_b, width), lambda i: (i, 0))

    def const_spec(arr):
        return pl.BlockSpec(arr.shape, lambda i: (0, 0))   # VMEM-resident

    flops = 2 * b_pad * (IN_PAD * LANES + 2 * LANES * LANES)
    transcendentals = 2 * b_pad * LANES
    bytes_accessed = (
        b_pad * IN_PAD * 4 + b_pad * LANES * 4
        + sum(int(a.size) * a.dtype.itemsize for a in (w1, b1, w2, b2, w3, b3)))

    out_pad = pl.pallas_call(
        _ode_kernel,
        out_shape=jax.ShapeDtypeStruct((b_pad, LANES), jnp.float32),
        grid=(n_tiles,),
        in_specs=[batch_spec(IN_PAD),
                  const_spec(w1), const_spec(b1),
                  const_spec(w2), const_spec(b2),
                  const_spec(w3), const_spec(b3)],
        out_specs=batch_spec(LANES),
        compiler_params=pltpu.CompilerParams(
            dimension_semantics=("parallel",)),
        cost_estimate=pl.CostEstimate(flops=flops,
                                      transcendentals=transcendentals,
                                      bytes_accessed=bytes_accessed),
    )(y_in, w1, b1, w2, b2, w3, b3)

    return out_pad[:B, :2]


def _reference(y, params):
    """Pure-JAX reference for correctness checking."""
    (wy1, by1, wy2, by2, wx1, bx1, wx2, bx2, wx3, bx3) = params
    ye = jnp.concatenate([y, y ** 3], axis=-1)
    y_out = jnp.tanh(ye @ wy1 + by1) @ wy2 + by2
    h = jnp.tanh(jnp.tanh(ye @ wx1 + bx1) @ wx2 + bx2)
    x_out = h @ wx3 + bx3
    return x_out + y_out


if __name__ == "__main__":
    key = jax.random.PRNGKey(0)
    pkey, ykey1, ykey2 = jax.random.split(key, 3)

    params = init_params(pkey)
    packed_bf16 = prepare_params(params)                    # default: bf16 MXU operands
    packed_f32 = prepare_params(params, jnp.float32)        # exact-path check
    t = jnp.float32(0.0)                                     # unused, mirrors PyTorch signature

    # Small shape consistent with the module (state dim = 2).
    B = 8
    y = jax.random.normal(ykey1, (B, 2), jnp.float32)
    ref = _reference(y, params)

    out_f32 = jax.block_until_ready(ode_func_layered_combined(t, y, packed_f32))
    assert out_f32.shape == (B, 2), out_f32.shape
    assert jnp.allclose(out_f32, ref, atol=1e-4, rtol=1e-4), (out_f32, ref)

    out_bf16 = jax.block_until_ready(ode_func_layered_combined(t, y, packed_bf16))
    assert out_bf16.shape == (B, 2), out_bf16.shape
    assert jnp.allclose(out_bf16, ref, atol=2e-2, rtol=2e-2), (out_bf16, ref)

    # Larger batch: exercises the multi-tile grid and the row-padding path.
    B2 = 2056
    y2 = jax.random.normal(ykey2, (B2, 2), jnp.float32)
    ref2 = _reference(y2, params)
    out2 = jax.block_until_ready(ode_func_layered_combined(t, y2, packed_bf16))
    assert out2.shape == (B2, 2), out2.shape
    assert jnp.allclose(out2, ref2, atol=2e-2, rtol=2e-2), "large-batch mismatch"

    print("KERNEL_OK")
</pallas_src>

<mosaic_0001>
module attributes {stable_mosaic.version = 11 : i64} {
  func.func @_ode_kernel(%arg0: i32, %arg1: memref<8x8xf32, #tpu.memory_space<vmem>>, %arg2: memref<8x128xf32, #tpu.memory_space<vmem>>, %arg3: memref<1x128xf32, #tpu.memory_space<vmem>>, %arg4: memref<128x128xf32, #tpu.memory_space<vmem>>, %arg5: memref<1x128xf32, #tpu.memory_space<vmem>>, %arg6: memref<128x128xf32, #tpu.memory_space<vmem>>, %arg7: memref<1x128xf32, #tpu.memory_space<vmem>>, %arg8: memref<8x128xf32, #tpu.memory_space<vmem>>) attributes {dimension_semantics = [#tpu.dimension_semantics<parallel>], iteration_bounds = array<i64: 1>, scalar_prefetch = 0 : i64, scratch_operands = 0 : i64, tpu.core_type = #tpu.core_type<tc>, window_params = [{transform_indices = @transform_0, window_bounds = array<i64: 8, 8>}, {pipeline_mode = #tpu.pipeline_mode<synchronous>, transform_indices = @transform_1, window_bounds = array<i64: 8, 128>}, {pipeline_mode = #tpu.pipeline_mode<synchronous>, transform_indices = @transform_2, window_bounds = array<i64: 1, 128>}, {pipeline_mode = #tpu.pipeline_mode<synchronous>, transform_indices = @transform_3, window_bounds = array<i64: 128, 128>}, {pipeline_mode = #tpu.pipeline_mode<synchronous>, transform_indices = @transform_4, window_bounds = array<i64: 1, 128>}, {pipeline_mode = #tpu.pipeline_mode<synchronous>, transform_indices = @transform_5, window_bounds = array<i64: 128, 128>}, {pipeline_mode = #tpu.pipeline_mode<synchronous>, transform_indices = @transform_6, window_bounds = array<i64: 1, 128>}, {transform_indices = @transform_7, window_bounds = array<i64: 8, 128>}]} {
    %c0 = arith.constant 0 : index
    %c0_0 = arith.constant 0 : index
    %0 = vector.load %arg1[%c0, %c0_0] : memref<8x8xf32, #tpu.memory_space<vmem>>, vector<8x8xf32>
    %c0_1 = arith.constant 0 : index
    %c0_2 = arith.constant 0 : index
    %1 = vector.load %arg2[%c0_1, %c0_2] : memref<8x128xf32, #tpu.memory_space<vmem>>, vector<8x128xf32>
    %cst = arith.constant dense<0.000000e+00> : vector<8x128xf32>
    %2 = tpu.matmul %0, %1, %cst {dimension_numbers = #tpu.dot_dimension_numbers<[1], [0], [0], [1], [0, 0, 1, 1], [], []>} : vector<8x8xf32>, vector<8x128xf32>, vector<8x128xf32> -> vector<8x128xf32>
    %c0_3 = arith.constant 0 : index
    %c0_4 = arith.constant 0 : index
    %3 = vector.load %arg3[%c0_3, %c0_4] : memref<1x128xf32, #tpu.memory_space<vmem>>, vector<1x128xf32>
    %4 = vector.broadcast %3 : vector<1x128xf32> to vector<8x128xf32>
    %5 = arith.addf %2, %4 : vector<8x128xf32>
    %6 = math.tanh %5 : vector<8x128xf32>
    %c0_5 = arith.constant 0 : index
    %c0_6 = arith.constant 0 : index
    %7 = vector.load %arg4[%c0_5, %c0_6] : memref<128x128xf32, #tpu.memory_space<vmem>>, vector<128x128xf32>
    %cst_7 = arith.constant dense<0.000000e+00> : vector<8x128xf32>
    %8 = tpu.matmul %6, %7, %cst_7 {dimension_numbers = #tpu.dot_dimension_numbers<[1], [0], [0], [1], [0, 0, 1, 1], [], []>} : vector<8x128xf32>, vector<128x128xf32>, vector<8x128xf32> -> vector<8x128xf32>
    %c0_8 = arith.constant 0 : index
    %c0_9 = arith.constant 0 : index
    %9 = vector.load %arg5[%c0_8, %c0_9] : memref<1x128xf32, #tpu.memory_space<vmem>>, vector<1x128xf32>
    %10 = vector.broadcast %9 : vector<1x128xf32> to vector<8x128xf32>
    %11 = arith.addf %8, %10 : vector<8x128xf32>
    %12 = math.tanh %11 : vector<8x128xf32>
    %13 = tpu.iota {dimensions = array<i32: 1>} : vector<8x128xi32>
    %c64_i32 = arith.constant 64 : i32
    %14 = vector.broadcast %c64_i32 : i32 to vector<8x128xi32>
    %15 = arith.cmpi slt, %13, %14 : vector<8x128xi32>
    %16 = arith.select %15, %6, %12 : vector<8x128xi1>, vector<8x128xf32>
    %c0_10 = arith.constant 0 : index
    %c0_11 = arith.constant 0 : index
    %17 = vector.load %arg6[%c0_10, %c0_11] : memref<128x128xf32, #tpu.memory_space<vmem>>, vector<128x128xf32>
    %cst_12 = arith.constant dense<0.000000e+00> : vector<8x128xf32>
    %18 = tpu.matmul %16, %17, %cst_12 {dimension_numbers = #tpu.dot_dimension_numbers<[1], [0], [0], [1], [0, 0, 1, 1], [], []>} : vector<8x128xf32>, vector<128x128xf32>, vector<8x128xf32> -> vector<8x128xf32>
    %c0_13 = arith.constant 0 : index
    %c0_14 = arith.constant 0 : index
    %19 = vector.load %arg7[%c0_13, %c0_14] : memref<1x128xf32, #tpu.memory_space<vmem>>, vector<1x128xf32>
    %20 = vector.broadcast %19 : vector<1x128xf32> to vector<8x128xf32>
    %21 = arith.addf %18, %20 : vector<8x128xf32>
    %c0_15 = arith.constant 0 : index
    %c0_16 = arith.constant 0 : index
    %22 = vector.load %arg8[%c0_15, %c0_16] : memref<8x128xf32, #tpu.memory_space<vmem>>, vector<8x128xf32>
    tpu.vector_store %arg8[%c0_15, %c0_16], %21 {strides = array<i32>} : memref<8x128xf32, #tpu.memory_space<vmem>>, vector<8x128xf32>,
    return
  }
  func.func @transform_0(%arg0: i32) -> (i32, i32) {
    %c0_i32 = arith.constant 0 : i32
    %c0_i32_0 = arith.constant 0 : i32
    return %arg0, %c0_i32 : i32, i32
  }
  func.func @transform_1(%arg0: i32) -> (i32, i32) {
    %c0_i32 = arith.constant 0 : i32
    %c0_i32_0 = arith.constant 0 : i32
    %c0_i32_1 = arith.constant 0 : i32
    return %c0_i32, %c0_i32_0 : i32, i32
  }
  func.func @transform_2(%arg0: i32) -> (i32, i32) {
    %c0_i32 = arith.constant 0 : i32
    %c0_i32_0 = arith.constant 0 : i32
    %c0_i32_1 = arith.constant 0 : i32
    return %c0_i32, %c0_i32_0 : i32, i32
  }
  func.func @transform_3(%arg0: i32) -> (i32, i32) {
    %c0_i32 = arith.constant 0 : i32
    %c0_i32_0 = arith.constant 0 : i32
    %c0_i32_1 = arith.constant 0 : i32
    return %c0_i32, %c0_i32_0 : i32, i32
  }
  func.func @transform_4(%arg0: i32) -> (i32, i32) {
    %c0_i32 = arith.constant 0 : i32
    %c0_i32_0 = arith.constant 0 : i32
    %c0_i32_1 = arith.constant 0 : i32
    return %c0_i32, %c0_i32_0 : i32, i32
  }
  func.func @transform_5(%arg0: i32) -> (i32, i32) {
    %c0_i32 = arith.constant 0 : i32
    %c0_i32_0 = arith.constant 0 : i32
    %c0_i32_1 = arith.constant 0 : i32
    return %c0_i32, %c0_i32_0 : i32, i32
  }
  func.func @transform_6(%arg0: i32) -> (i32, i32) {
    %c0_i32 = arith.constant 0 : i32
    %c0_i32_0 = arith.constant 0 : i32
    %c0_i32_1 = arith.constant 0 : i32
    return %c0_i32, %c0_i32_0 : i32, i32
  }
  func.func @transform_7(%arg0: i32) -> (i32, i32) {
    %c0_i32 = arith.constant 0 : i32
    %c0_i32_0 = arith.constant 0 : i32
    return %arg0, %c0_i32 : i32, i32
  }
}

</mosaic_0001>

<llo_original>
// kernel: ode_func_layered_combined.1
$region0: #{ode_func_layered_combined.1}
  #allocation0 [shape = 'u32[]', space=smem, size = 0x4, offset = 0x4, fixed_abs, tag = 'smem constant byte address 0x4 - core index']
  #allocation1 [shape = 'u32[72,128]{1,0:T(1,128)}', space=vmem, size = 0x9000, scoped, tag = 'internal scratch']
  %s0 = inlined_call_operand.vmem [shape: f32[8,8], index: 0, kind: input, shape index: {}]
  %s1 = inlined_call_operand.vmem [shape: f32[8,128], index: 1, kind: input, shape index: {}]
  %s2 = inlined_call_operand.vmem [shape: f32[1,128], index: 2, kind: input, shape index: {}]
  %s3 = inlined_call_operand.hbm [shape: f32[128,128], index: 3, kind: input, shape index: {}]
  %s4 = inlined_call_operand.vmem [shape: f32[1,128], index: 4, kind: input, shape index: {}]
  %s5 = inlined_call_operand.hbm [shape: f32[128,128], index: 5, kind: input, shape index: {}]
  %s6 = inlined_call_operand.vmem [shape: f32[1,128], index: 6, kind: input, shape index: {}]
  %s7 = inlined_call_operand.vmem [shape: f32[8,128], index: 7, kind: output, shape index: {}]
  %s8 = sld [smem:[#allocation0]]
  $region46: #{ode_func_layered_combined.1} parent=0
    _
  %s10 = ssub.s32 1, %s8
  %s11 = scalar_select 0, %s10, %s8
  $region1: #{ode_func_layered_combined.1} parent=0
    #allocation2 [shape = 'u8[65536]{0}', space=vmem, size = 0x10000, scoped, tag = 'input window, operand 3, single buffered']
    #allocation3 [shape = 's32[1]{0}', space=sflag, size = 0x4, scoped, tag = 'scoped memory for ode_func_layered_combined.1']
    #allocation4 [shape = 'u8[65536]{0}', space=vmem, size = 0x10000, scoped, tag = 'input window, operand 5, single buffered']
    #allocation5 [shape = 's32[1]{0}', space=sflag, size = 0x4, scoped, tag = 'scoped memory for ode_func_layered_combined.1']
    %12 = vsyncpa [#allocation3], 0
    %13 = vsyncpa [#allocation5], 0
    // Predicated region
    $region2: #{ode_func_layered_combined.1} parent=1 // pred_check
      _
    $region3: #{ode_func_layered_combined.1} parent=1 // pred_check_branch
      %15 = sbr.rel (0) target = $region5
    $region4: #{ode_func_layered_combined.1} parent=1 // pred_region
      _
    $region5: #{ode_func_layered_combined.1} parent=1 // pred_fallthru
      _
    // Predicated region
    $region6: #{ode_func_layered_combined.1} parent=1 // pred_check
      _
    $region7: #{ode_func_layered_combined.1} parent=1 // pred_check_branch
      %17 = sbr.rel (0) target = $region9
    $region8: #{ode_func_layered_combined.1} parent=1 // pred_region
      _
    $region9: #{ode_func_layered_combined.1} parent=1 // pred_fallthru
      _
    // Predicated region
    $region10: #{ode_func_layered_combined.1} parent=1 // pred_check
      _
    $region11: #{ode_func_layered_combined.1} parent=1 // pred_check_branch
      %19 = sbr.rel (0) target = $region13
    $region12: #{ode_func_layered_combined.1} parent=1 // pred_region
      _
    $region13: #{ode_func_layered_combined.1} parent=1 // pred_fallthru
      _
    // Predicated region
    $region14: #{ode_func_layered_combined.1} parent=1 // pred_check
      _
    $region15: #{ode_func_layered_combined.1} parent=1 // pred_check_branch
      %21 = sbr.rel (0) target = $region17
    $region16: #{ode_func_layered_combined.1} parent=1 // pred_region
      %23 = vsyncadd [#allocation3], 0
      %s24 = sshll.u32 %s3, 4
      %s25 = int_to_ptr.hbm [resolvable:$true] %s24
      %s26 = sshll.u32 [#allocation2], 4
      %s27 = int_to_ptr.vmem [resolvable:$true] %s26
      %32 = dma.hbm_to_vmem [thread:$0]  %s25, 2048, %s27, [#allocation3], 128, 128, 8
    $region17: #{ode_func_layered_combined.1} parent=1 // pred_fallthru
      _
    // Predicated region
    $region18: #{ode_func_layered_combined.1} parent=1 // pred_check
      _
    $region19: #{ode_func_layered_combined.1} parent=1 // pred_check_branch
      %34 = sbr.rel (0) target = $region21
    $region20: #{ode_func_layered_combined.1} parent=1 // pred_region
      _
    $region21: #{ode_func_layered_combined.1} parent=1 // pred_fallthru
      _
    // Predicated region
    $region22: #{ode_func_layered_combined.1} parent=1 // pred_check
      _
    $region23: #{ode_func_layered_combined.1} parent=1 // pred_check_branch
      %36 = sbr.rel (0) target = $region25
    $region24: #{ode_func_layered_combined.1} parent=1 // pred_region
      %38 = vsyncadd [#allocation5], 0
      %s39 = sshll.u32 %s5, 4
      %s40 = int_to_ptr.hbm [resolvable:$true] %s39
      %s41 = sshll.u32 [#allocation4], 4
      %s42 = int_to_ptr.vmem [resolvable:$true] %s41
      %47 = dma.hbm_to_vmem [thread:$0]  %s40, 2048, %s42, [#allocation5], 128, 128, 8
    $region25: #{ode_func_layered_combined.1} parent=1 // pred_fallthru
      _
    // Predicated region
    $region26: #{ode_func_layered_combined.1} parent=1 // pred_check
      _
    $region27: #{ode_func_layered_combined.1} parent=1 // pred_check_branch
      %49 = sbr.rel (0) target = $region29
    $region28: #{ode_func_layered_combined.1} parent=1 // pred_region
      _
    $region29: #{ode_func_layered_combined.1} parent=1 // pred_fallthru
      _
    // Predicated region
    $region30: #{ode_func_layered_combined.1} parent=1 // pred_check
      _
    $region31: #{ode_func_layered_combined.1} parent=1 // pred_check_branch
      %51 = sbr.rel (0) target = $region33
    $region32: #{ode_func_layered_combined.1} parent=1 // pred_region
      %53 = dma.done [#allocation3], 2048
    $region33: #{ode_func_layered_combined.1} parent=1 // pred_fallthru
      _
    // Predicated region
    $region34: #{ode_func_layered_combined.1} parent=1 // pred_check
      _
    $region35: #{ode_func_layered_combined.1} parent=1 // pred_check_branch
      %55 = sbr.rel (0) target = $region37
    $region36: #{ode_func_layered_combined.1} parent=1 // pred_region
      %57 = dma.done [#allocation5], 2048
    $region37: #{ode_func_layered_combined.1} parent=1 // pred_fallthru
      _
    %v58 = vld [vmem:[%s0] sm:$0xff]
    %v59 = vld [vmem:[%s1] sm:$0xff]
    %v60 = vld [vmem:[%s2] sm:$0x1]
    %v62 = vperm.slane %v60, 0
    %vm64 = vcmask 64512
    %v66 = vsel %vm64, %v58, 0
    %68 = vmatpush.msra.mxu0 0.0
    %69 = vmatpush.msra.mxu0 0.0
    %70 = vmatpush.msra.mxu0 0.0
    %71 = vmatpush.msra.mxu0 0.0
    %72 = vmatpush.msra.mxu0 0.0
    %73 = vmatpush.msra.mxu0 0.0
    %74 = vmatpush.msra.mxu0 0.0
    %75 = vmatpush.msra.mxu0 0.0
    %76 = vmatpush.msra.mxu0 0.0
    %77 = vmatpush.msra.mxu0 0.0
    %78 = vmatpush.msra.mxu0 0.0
    %79 = vmatpush.msra.mxu0 0.0
    %80 = vmatpush.msra.mxu0 0.0
    %81 = vmatpush.msra.mxu0 0.0
    %82 = vmatpush.msra.mxu0 0.0
    %83 = vmatpush.msra.mxu0 %v59
    %84 = vmatmul.f32.gmra.mxu0 %v66
    %v85 = vpop.f32.mrf.mxu0
    %v86 = vadd.f32 %v62, %v85
    %87 = vdwg.mxu0
    %v88 = vtanh.pop %v86
    %v89 = vld [vmem:[#allocation2] sm:$0xff]
    %v90 = vld [vmem:[#allocation2 + $0x8] sm:$0xff]
    %v91 = vld [vmem:[#allocation2 + $0x10] sm:$0xff]
    %v92 = vld [vmem:[#allocation2 + $0x18] sm:$0xff]
    %v93 = vld [vmem:[#allocation2 + $0x20] sm:$0xff]
    %v94 = vld [vmem:[#allocation2 + $0x28] sm:$0xff]
    %v95 = vld [vmem:[#allocation2 + $0x30] sm:$0xff]
    %v96 = vld [vmem:[#allocation2 + $0x38] sm:$0xff]
    %v97 = vld [vmem:[#allocation2 + $0x40] sm:$0xff]
    %v98 = vld [vmem:[#allocation2 + $0x48] sm:$0xff]
    %v99 = vld [vmem:[#allocation2 + $0x50] sm:$0xff]
    %v100 = vld [vmem:[#allocation2 + $0x58] sm:$0xff]
    %v101 = vld [vmem:[#allocation2 + $0x60] sm:$0xff]
    %v102 = vld [vmem:[#allocation2 + $0x68] sm:$0xff]
    %v103 = vld [vmem:[#allocation2 + $0x70] sm:$0xff]
    %v104 = vld [vmem:[#allocation2 + $0x78] sm:$0xff]
    %v105 = vld [vmem:[%s4] sm:$0x1]
    %v107 = vperm.slane %v105, 0
    %109 = vmatpush.msra.mxu0 %v104
    %110 = vmatpush.msra.mxu0 %v103
    %111 = vmatpush.msra.mxu0 %v102
    %112 = vmatpush.msra.mxu0 %v101
    %113 = vmatpush.msra.mxu0 %v100
    %114 = vmatpush.msra.mxu0 %v99
    %115 = vmatpush.msra.mxu0 %v98
    %116 = vmatpush.msra.mxu0 %v97
    %117 = vmatpush.msra.mxu0 %v96
    %118 = vmatpush.msra.mxu0 %v95
    %119 = vmatpush.msra.mxu0 %v94
    %120 = vmatpush.msra.mxu0 %v93
    %121 = vmatpush.msra.mxu0 %v92
    %122 = vmatpush.msra.mxu0 %v91
    %123 = vmatpush.msra.mxu0 %v90
    %124 = vmatpush.msra.mxu0 %v89
    %125 = vmatmul.f32.gmra.mxu0 %v88
    %v126 = vpop.f32.mrf.mxu0
    %v127 = vadd.f32 %v107, %v126
    %128 = vdwg.mxu0
    %v129 = vtanh.pop %v127
    %v130 = vlaneseq
    %v131 = vand.u32 %v130, 127
    %vm132 = vcmp.lt.s32.totalorder %v131, 64
    %v133 = vsel %vm132, %v88, %v129
    %v134 = vld [vmem:[#allocation4] sm:$0xff]
    %v135 = vld [vmem:[#allocation4 + $0x8] sm:$0xff]
    %v136 = vld [vmem:[#allocation4 + $0x10] sm:$0xff]
    %v137 = vld [vmem:[#allocation4 + $0x18] sm:$0xff]
    %v138 = vld [vmem:[#allocation4 + $0x20] sm:$0xff]
    %v139 = vld [vmem:[#allocation4 + $0x28] sm:$0xff]
    %v140 = vld [vmem:[#allocation4 + $0x30] sm:$0xff]
    %v141 = vld [vmem:[#allocation4 + $0x38] sm:$0xff]
    %v142 = vld [vmem:[#allocation4 + $0x40] sm:$0xff]
    %v143 = vld [vmem:[#allocation4 + $0x48] sm:$0xff]
    %v144 = vld [vmem:[#allocation4 + $0x50] sm:$0xff]
    %v145 = vld [vmem:[#allocation4 + $0x58] sm:$0xff]
    %v146 = vld [vmem:[#allocation4 + $0x60] sm:$0xff]
    %v147 = vld [vmem:[#allocation4 + $0x68] sm:$0xff]
    %v148 = vld [vmem:[#allocation4 + $0x70] sm:$0xff]
    %v149 = vld [vmem:[#allocation4 + $0x78] sm:$0xff]
    %v150 = vld [vmem:[%s6] sm:$0x1]
    %v152 = vperm.slane %v150, 0
    %154 = vmatpush.msra.mxu0 %v149
    %155 = vmatpush.msra.mxu0 %v148
    %156 = vmatpush.msra.mxu0 %v147
    %157 = vmatpush.msra.mxu0 %v146
    %158 = vmatpush.msra.mxu0 %v145
    %159 = vmatpush.msra.mxu0 %v144
    %160 = vmatpush.msra.mxu0 %v143
    %161 = vmatpush.msra.mxu0 %v142
    %162 = vmatpush.msra.mxu0 %v141
    %163 = vmatpush.msra.mxu0 %v140
    %164 = vmatpush.msra.mxu0 %v139
    %165 = vmatpush.msra.mxu0 %v138
    %166 = vmatpush.msra.mxu0 %v137
    %167 = vmatpush.msra.mxu0 %v136
    %168 = vmatpush.msra.mxu0 %v135
    %169 = vmatpush.msra.mxu0 %v134
    %170 = vmatmul.f32.gmra.mxu0 %v133
    %v171 = vpop.f32.mrf.mxu0
    %v172 = vadd.f32 %v152, %v171
    %173 = vdwg.mxu0
    %174 = vst [vmem:[%s7] sm:$0xff] %v172
    // Predicated region
    $region38: #{ode_func_layered_combined.1} parent=1 // pred_check
      _
    $region39: #{ode_func_layered_combined.1} parent=1 // pred_check_branch
      %176 = sbr.rel (0) target = $region41
    $region40: #{ode_func_layered_combined.1} parent=1 // pred_region
      _
    $region41: #{ode_func_layered_combined.1} parent=1 // pred_fallthru
      _
    // Predicated region
    $region42: #{ode_func_layered_combined.1} parent=1 // pred_check
      _
    $region43: #{ode_func_layered_combined.1} parent=1 // pred_check_branch
      %178 = sbr.rel (0) target = $region45
    $region44: #{ode_func_layered_combined.1} parent=1 // pred_region
      _
    $region45: #{ode_func_layered_combined.1} parent=1 // pred_fallthru
      _
    %179 = vsyncpa [#allocation3], 1
    %180 = vsyncpa [#allocation5], 1

</llo_original>
